<compile_context>
chip_gen: v6e
topology: v6e:2x2x1
jax: 0.10.0
libtpu: 0.0.40
codegen_flags: <defaults>
</compile_context>

<pallas_src>
import functools

import jax
import jax.numpy as jnp
from jax.experimental import pallas as pl
from jax.experimental.pallas import tpu as pltpu


def _round_up(x, m):
    return (x + m - 1) // m * m


def _vmem_capacity_bytes():
    """Physical VMEM of the local TPU generation (fallback 64 MiB: safe on
    v5e / v6e / v7x)."""
    try:
        cap = int(pltpu.get_tpu_info().vmem_capacity_bytes)
        if cap > 0:
            return cap
    except Exception:
        pass
    return 64 * 1024 * 1024


def _buffered_spec(block_shape, index_map, buffer_count):
    """BlockSpec with an explicit pipeline buffer depth; falls back to the
    default (double-buffered) spec if pipeline_mode is unavailable."""
    if buffer_count is None:
        return pl.BlockSpec(block_shape, index_map)
    try:
        return pl.BlockSpec(block_shape, index_map,
                            pipeline_mode=pl.Buffered(buffer_count))
    except (TypeError, AttributeError):
        return pl.BlockSpec(block_shape, index_map)


def _choose_tiles(h, t_pad, in_item, out_item, budget, tm_cap=2048):
    """Pick (tm, tn, w_buffers).

    tn: output-column tile (multiple of 128 dividing t_pad). tn == t_pad (W_all
        fully resident, single-buffered) when W_all takes <= budget/4;
        otherwise a smaller tn so the W column tiles double-buffer cheaply.
    tm: largest batch tile (multiple of 8, <= tm_cap) whose double-buffered
        x / out tiles plus the W / bias buffers fit `budget`.
    """
    w_bytes = h * t_pad * in_item
    if w_bytes <= budget // 4:
        tn, w_buffers = t_pad, 1          # resident, single-buffered
    else:
        tn, w_buffers = 128, 2
        cand = 256                        # prefer >=256 to match the wide MXU
        while (cand <= t_pad and t_pad % cand == 0
               and 2 * h * cand * in_item <= budget // 3):
            tn = cand
            cand *= 2

    tm = tm_cap
    while tm > 8:
        need = (2 * tm * h * in_item                 # x, double-buffered
                + 2 * tm * tn * out_item             # out, double-buffered
                + w_buffers * (h * tn + tn) * in_item)   # W_all + bias
        if need <= budget:
            break
        tm = max(8, (tm // 2) // 8 * 8)              # keep multiple of 8
    return tm, tn, w_buffers


def _fused_linear_kernel(x_ref, w_ref, b_ref, o_ref):
    # out = x @ W_all + b_all, accumulated in f32 on the MXU.
    acc = jnp.dot(x_ref[...], w_ref[...], preferred_element_type=jnp.float32)
    o_ref[...] = (acc + b_ref[...].astype(jnp.float32)).astype(o_ref.dtype)


@functools.partial(
    jax.jit,
    static_argnames=("tm", "tn", "w_buffers", "vmem_limit", "out_dtype"))
def _fused_forward(x, w_all, b_all, *, tm, tn, w_buffers, vmem_limit, out_dtype):
    """x: [B_pad, H] (B_pad % tm == 0), w_all: [H, T_pad], b_all: [1, T_pad]."""
    b_pad, h = x.shape
    _, t_pad = w_all.shape
    nb, nn = b_pad // tm, t_pad // tn
    # Single-buffer W/bias only when their block index is grid-invariant.
    wb = 1 if (w_buffers == 1 and nn == 1) else None
    return pl.pallas_call(
        _fused_linear_kernel,
        out_shape=jax.ShapeDtypeStruct((b_pad, t_pad), out_dtype),
        grid=(nb, nn),
        in_specs=[
            # x: batch-tiled, constant in j (Pallas skips the re-DMA when the
            # block index does not change between consecutive grid steps).
            # Default double-buffering; deeper pl.Buffered(3) only if a profile
            # shows exposed DMA gaps -- otherwise spend the VMEM on a bigger tm.
            pl.BlockSpec((tm, h), lambda i, j: (i, 0)),
            _buffered_spec((h, tn), lambda i, j: (0, j), wb),   # W_all
            _buffered_spec((1, tn), lambda i, j: (0, j), wb),   # bias
        ],
        out_specs=pl.BlockSpec((tm, tn), lambda i, j: (i, j)),
        compiler_params=pltpu.CompilerParams(
            # Every (i, j) writes a distinct output tile -> both axes are
            # megacore-shardable (2x on v7x dual-TC, no-op on v5e/v6e).
            dimension_semantics=("parallel", "parallel"),
            vmem_limit_bytes=vmem_limit,
        ),
    )(x, w_all, b_all)


class MultiOutsPallas:
    """JAX/Pallas equivalent of the PyTorch MultiOuts forward pass."""

    def __init__(self, hidden_dim, tasks, key,
                 compute_dtype=jnp.bfloat16, out_dtype=None):
        self.tasks = tasks
        self.hidden_dim = hidden_dim
        self.task_sizes = [t for _, t in tasks.items()]
        self.compute_dtype = jnp.dtype(compute_dtype)
        self.out_dtype = jnp.dtype(out_dtype) if out_dtype is not None \
            else self.compute_dtype

        # Per-head f32 params (reference / verification), matching nn.Linear's
        # uniform(-1/sqrt(H), 1/sqrt(H)) init; weights stored transposed as
        # [H, T_i] so the kernel computes x @ W directly.
        self.params = []
        bound = 1.0 / (hidden_dim ** 0.5)
        for t in self.task_sizes:
            key, kw, kb = jax.random.split(key, 3)
            w = jax.random.uniform(kw, (hidden_dim, t), jnp.float32, -bound, bound)
            b = jax.random.uniform(kb, (1, t), jnp.float32, -bound, bound)
            self.params.append((w, b))

        # Fused, lane-dense parameters: concat all heads along the output dim,
        # zero-pad to a multiple of 128 (unmasked vst), store in compute dtype.
        t_total = sum(self.task_sizes)
        t_pad = _round_up(max(t_total, 1), 128)
        w_cat = jnp.concatenate([w for (w, _) in self.params], axis=1)
        b_cat = jnp.concatenate([b for (_, b) in self.params], axis=1)
        self.w_all = jnp.pad(w_cat, ((0, 0), (0, t_pad - t_total))).astype(
            self.compute_dtype)
        self.b_all = jnp.pad(b_cat, ((0, 0), (0, t_pad - t_total))).astype(
            self.compute_dtype)
        self.t_total = t_total
        self.t_pad = t_pad

        # Per-task column offsets for the (free) static output slices.
        self.offsets = []
        off = 0
        for t in self.task_sizes:
            self.offsets.append(off)
            off += t

        # Generation-aware tiling policy (batch independent).
        capacity = _vmem_capacity_bytes()
        budget = (capacity * 7) // 10
        self.vmem_limit = int(min(capacity - (4 << 20), budget + (8 << 20)))
        self.tm_cap, self.tn, self.w_buffers = _choose_tiles(
            hidden_dim, t_pad,
            self.compute_dtype.itemsize, self.out_dtype.itemsize, budget)

    def __call__(self, x):
        """x: [B, H] -> list of per-task logits [B, t_i] (PyTorch semantics)."""
        b, h = x.shape
        assert h == self.hidden_dim

        # Batch tile: the init-time tm_cap in steady state (batch independent);
        # for batches that would otherwise be a single grid step, split into
        # two tiles (costs at most ~2 sublanes of padding) so v7x's second
        # TensorCore gets work.
        tm = self.tm_cap
        if b < 2 * tm:
            tm = max(8, _round_up(-(-b // 2), 8)) if b >= 16 else 8
        b_pad = _round_up(max(b, 1), tm)

        xc = x.astype(self.compute_dtype)
        if b_pad != b:
            xc = jnp.pad(xc, ((0, b_pad - b), (0, 0)))

        out_all = _fused_forward(
            xc, self.w_all, self.b_all,
            tm=tm, tn=self.tn, w_buffers=self.w_buffers,
            vmem_limit=self.vmem_limit, out_dtype=self.out_dtype)

        # Strip batch padding and split into per-task outputs (static slices).
        out_all = out_all[:b]
        return [
            out_all[:, off:off + t]
            for off, t in zip(self.offsets, self.task_sizes)
        ]

    # TODO(synk): masked_loss / single_loss (BCE/CE with -1 masking) are
    # training-time loss glue, not part of forward(); not implemented as a kernel.


if __name__ == "__main__":
    key = jax.random.PRNGKey(0)
    k_in, k_params = jax.random.split(key)

    batch, hidden_dim = 8, 32
    tasks = {"binary_task": 1, "three_way": 3, "five_way": 5}

    x = jax.random.normal(k_in, (batch, hidden_dim), jnp.float32)

    # Default bf16 compute path (bandwidth-optimized).
    model_bf16 = MultiOutsPallas(hidden_dim, tasks, k_params)
    outs_bf16 = jax.block_until_ready(model_bf16(x))

    # f32 path for tight numerical parity with the PyTorch module.
    model_f32 = MultiOutsPallas(hidden_dim, tasks, k_params,
                                compute_dtype=jnp.float32)
    outs_f32 = jax.block_until_ready(model_f32(x))

    for (w, b), o16, o32, t in zip(model_f32.params, outs_bf16, outs_f32,
                                   model_f32.task_sizes):
        ref = x @ w + b
        assert o32.shape == (batch, t), (o32.shape, (batch, t))
        assert o16.shape == (batch, t), (o16.shape, (batch, t))
        assert jnp.allclose(o32, ref, atol=1e-5, rtol=1e-5)
        assert jnp.allclose(o16.astype(jnp.float32), ref, atol=3e-2, rtol=3e-2)

    print("KERNEL_OK")
</pallas_src>

<mosaic_0001>
module attributes {stable_mosaic.version = 11 : i64} {
  func.func @_fused_linear_kernel(%arg0: i32, %arg1: i32, %arg2: memref<8x32xbf16, #tpu.memory_space<vmem>>, %arg3: memref<32x128xbf16, #tpu.memory_space<vmem>>, %arg4: memref<1x128xbf16, #tpu.memory_space<vmem>>, %arg5: memref<8x128xbf16, #tpu.memory_space<vmem>>) attributes {dimension_semantics = [#tpu.dimension_semantics<parallel>, #tpu.dimension_semantics<parallel>], iteration_bounds = array<i64: 1, 1>, scalar_prefetch = 0 : i64, scratch_operands = 0 : i64, tpu.core_type = #tpu.core_type<tc>, window_params = [{transform_indices = @transform_0, window_bounds = array<i64: 8, 32>}, {pipeline_mode = #tpu.pipeline_mode<synchronous>, transform_indices = @transform_1, window_bounds = array<i64: 32, 128>}, {pipeline_mode = #tpu.pipeline_mode<synchronous>, transform_indices = @transform_2, window_bounds = array<i64: 1, 128>}, {transform_indices = @transform_3, window_bounds = array<i64: 8, 128>}]} {
    %c0 = arith.constant 0 : index
    %c0_0 = arith.constant 0 : index
    %0 = vector.load %arg2[%c0, %c0_0] : memref<8x32xbf16, #tpu.memory_space<vmem>>, vector<8x32xbf16>
    %c0_1 = arith.constant 0 : index
    %c0_2 = arith.constant 0 : index
    %1 = vector.load %arg3[%c0_1, %c0_2] : memref<32x128xbf16, #tpu.memory_space<vmem>>, vector<32x128xbf16>
    %cst = arith.constant dense<0.000000e+00> : vector<8x128xf32>
    %2 = tpu.matmul %0, %1, %cst {dimension_numbers = #tpu.dot_dimension_numbers<[1], [0], [0], [1], [0, 0, 1, 1], [], []>} : vector<8x32xbf16>, vector<32x128xbf16>, vector<8x128xf32> -> vector<8x128xf32>
    %c0_3 = arith.constant 0 : index
    %c0_4 = arith.constant 0 : index
    %3 = vector.load %arg4[%c0_3, %c0_4] : memref<1x128xbf16, #tpu.memory_space<vmem>>, vector<1x128xbf16>
    %4 = arith.extf %3 : vector<1x128xbf16> to vector<1x128xf32>
    %5 = vector.broadcast %4 : vector<1x128xf32> to vector<8x128xf32>
    %6 = arith.addf %2, %5 : vector<8x128xf32>
    %7 = arith.truncf %6 : vector<8x128xf32> to vector<8x128xbf16>
    %c0_5 = arith.constant 0 : index
    %c0_6 = arith.constant 0 : index
    %8 = vector.load %arg5[%c0_5, %c0_6] : memref<8x128xbf16, #tpu.memory_space<vmem>>, vector<8x128xbf16>
    tpu.vector_store %arg5[%c0_5, %c0_6], %7 {strides = array<i32>} : memref<8x128xbf16, #tpu.memory_space<vmem>>, vector<8x128xbf16>,
    return
  }
  func.func @transform_0(%arg0: i32, %arg1: i32) -> (i32, i32) {
    %c0_i32 = arith.constant 0 : i32
    %c0_i32_0 = arith.constant 0 : i32
    return %arg0, %c0_i32 : i32, i32
  }
  func.func @transform_1(%arg0: i32, %arg1: i32) -> (i32, i32) {
    %c0_i32 = arith.constant 0 : i32
    %c0_i32_0 = arith.constant 0 : i32
    return %c0_i32, %arg1 : i32, i32
  }
  func.func @transform_2(%arg0: i32, %arg1: i32) -> (i32, i32) {
    %c0_i32 = arith.constant 0 : i32
    %c0_i32_0 = arith.constant 0 : i32
    return %c0_i32, %arg1 : i32, i32
  }
  func.func @transform_3(%arg0: i32, %arg1: i32) -> (i32, i32) {
    %c0_i32 = arith.constant 0 : i32
    return %arg0, %arg1 : i32, i32
  }
}

</mosaic_0001>

<llo_original>
// kernel: _fused_forward.1
$region0: #{_fused_forward.1}
  #allocation0 [shape = 'u32[]', space=smem, size = 0x4, offset = 0x4, fixed_abs, tag = 'smem constant byte address 0x4 - core index']
  #allocation1 [shape = 'u32[144,128]{1,0:T(1,128)}', space=vmem, size = 0x12000, scoped, tag = 'internal scratch']
  %s0 = inlined_call_operand.hbm [shape: bf16[8,32], index: 0, kind: input, shape index: {}]
  %s1 = inlined_call_operand.hbm [shape: bf16[32,128], index: 1, kind: input, shape index: {}]
  %s2 = inlined_call_operand.vmem [shape: bf16[1,128], index: 2, kind: input, shape index: {}]
  %s3 = inlined_call_operand.hbm [shape: bf16[8,128], index: 3, kind: output, shape index: {}]
  %s4 = sld [smem:[#allocation0]]
  $region30: #{_fused_forward.1} parent=0
    _
  %s6 = ssub.s32 1, %s4
  %s7 = scalar_select 0, %s6, %s4
  $region1: #{_fused_forward.1} parent=0
    #allocation2 [shape = 'u8[2048]{0}', space=vmem, size = 0x800, scoped, tag = 'input window, operand 0, single buffered']
    #allocation3 [shape = 's32[1]{0}', space=sflag, size = 0x4, scoped, tag = 'scoped memory for _fused_forward.1']
    #allocation4 [shape = 's32[1]{0}', space=sflag, size = 0x4, scoped, tag = 'scoped memory for _fused_forward.1']
    #allocation5 [shape = 'u8[8192]{0}', space=vmem, size = 0x2000, scoped, tag = 'input window, operand 1, single buffered']
    #allocation6 [shape = 's32[1]{0}', space=sflag, size = 0x4, scoped, tag = 'scoped memory for _fused_forward.1']
    #allocation7 [shape = 'u8[2048]{0}', space=vmem, size = 0x800, scoped, tag = 'output window, operand 0, single buffered']
    %8 = vsyncpa [#allocation3], 0
    %9 = vsyncpa [#allocation6], 0
    %10 = vsyncpa [#allocation4], 0
    // Predicated region
    $region2: #{_fused_forward.1} parent=1 // pred_check
      _
    $region3: #{_fused_forward.1} parent=1 // pred_check_branch
      %12 = sbr.rel (0) target = $region5
    $region4: #{_fused_forward.1} parent=1 // pred_region
      %s14 = ssub.s32 64, 64
      %15 = vsyncadd [#allocation3], %s14
      %s17 = sshll.u32 [#allocation2], 4
      %s18 = int_to_ptr.vmem [resolvable:$true] %s17
      %20 = dma.hbm_to_vmem [thread:$0]  %s0, 64, %s18, [#allocation3]
    $region5: #{_fused_forward.1} parent=1 // pred_fallthru
      _
    // Predicated region
    $region6: #{_fused_forward.1} parent=1 // pred_check
      _
    $region7: #{_fused_forward.1} parent=1 // pred_check_branch
      %22 = sbr.rel (0) target = $region9
    $region8: #{_fused_forward.1} parent=1 // pred_region
      %s24 = ssub.s32 256, 256
      %25 = vsyncadd [#allocation6], %s24
      %s26 = sshll.u32 [#allocation5], 4
      %s27 = int_to_ptr.vmem [resolvable:$true] %s26
      %32 = dma.hbm_to_vmem [thread:$0]  %s1, 256, %s27, [#allocation6], 64, 64, 4
    $region9: #{_fused_forward.1} parent=1 // pred_fallthru
      _
    // Predicated region
    $region10: #{_fused_forward.1} parent=1 // pred_check
      _
    $region11: #{_fused_forward.1} parent=1 // pred_check_branch
      %34 = sbr.rel (0) target = $region13
    $region12: #{_fused_forward.1} parent=1 // pred_region
      _
    $region13: #{_fused_forward.1} parent=1 // pred_fallthru
      _
    // Predicated region
    $region14: #{_fused_forward.1} parent=1 // pred_check
      _
    $region15: #{_fused_forward.1} parent=1 // pred_check_branch
      %36 = sbr.rel (0) target = $region17
    $region16: #{_fused_forward.1} parent=1 // pred_region
      %37 = dma.done [#allocation3], 64
    $region17: #{_fused_forward.1} parent=1 // pred_fallthru
      _
    // Predicated region
    $region18: #{_fused_forward.1} parent=1 // pred_check
      _
    $region19: #{_fused_forward.1} parent=1 // pred_check_branch
      %39 = sbr.rel (0) target = $region21
    $region20: #{_fused_forward.1} parent=1 // pred_region
      %40 = dma.done [#allocation6], 256
    $region21: #{_fused_forward.1} parent=1 // pred_fallthru
      _
    %v42 = vld [vmem:[#allocation2] sm:$0xf]
    %v43 = vld [vmem:[#allocation5] sm:$0xf]
    %v44 = vld [vmem:[#allocation5 + $0x4] sm:$0xf]
    %v45 = vld [vmem:[#allocation5 + $0x8] sm:$0xf]
    %v46 = vld [vmem:[#allocation5 + $0xc] sm:$0xf]
    %v47 = vld [vmem:[%s2] sm:$0x1]
    %v48 = vunpack.c.l.bf16 %v47
    %v49 = vlaneseq
    %v50 = vshrl.u32 %v49, 7
    %v51 = vsub.s32 0, %v50
    %v52 = vrot.slane %v48, %v51
    %v57 = vunpack.c.l.b16 %v43
    %v58 = vunpack.c.l.b16 %v44
    %v59 = vunpack.c.l.b16 %v45
    %v60 = vunpack.c.l.b16 %v46
    %v61 = vpack.c.b16 %v58, %v57
    %v62 = vpack.c.b16 %v60, %v59
    %vm65 = vcmask 261120
    %v67 = vsel %vm65, %v42, 0
    %69 = vmatprep.subr.bf16.mxu0 0
    %70 = vmatpush1.bf16.msra.mxu0 0
    %71 = vmatprep.subr.bf16.mxu0 0
    %72 = vmatpush1.bf16.msra.mxu0 0
    %73 = vmatprep.subr.bf16.mxu0 0
    %74 = vmatpush1.bf16.msra.mxu0 0
    %75 = vmatprep.subr.bf16.mxu0 0
    %76 = vmatpush1.bf16.msra.mxu0 0
    %77 = vmatprep.subr.bf16.mxu0 0
    %78 = vmatpush1.bf16.msra.mxu0 0
    %79 = vmatprep.subr.bf16.mxu0 0
    %80 = vmatpush1.bf16.msra.mxu0 0
    %81 = vmatprep.subr.bf16.mxu0 0
    %82 = vmatpush1.bf16.msra.mxu0 %v62
    %83 = vmatprep.subr.bf16.mxu0 0
    %84 = vmatpush1.bf16.msra.mxu0 %v61
    %85 = vmatprep.subr.bf16.mxu0 0
    %86 = vmatpush2.bf16.msra.mxu0 0
    %87 = vmatprep.subr.bf16.mxu0 0
    %88 = vmatpush2.bf16.msra.mxu0 0
    %89 = vmatprep.subr.bf16.mxu0 0
    %90 = vmatpush2.bf16.msra.mxu0 0
    %91 = vmatprep.subr.bf16.mxu0 0
    %92 = vmatpush2.bf16.msra.mxu0 0
    %93 = vmatprep.subr.bf16.mxu0 0
    %94 = vmatpush2.bf16.msra.mxu0 0
    %95 = vmatprep.subr.bf16.mxu0 0
    %96 = vmatpush2.bf16.msra.mxu0 0
    %97 = vmatprep.subr.bf16.mxu0 0
    %98 = vmatpush2.bf16.msra.mxu0 0
    %99 = vmatprep.subr.bf16.mxu0 0
    %100 = vmatpush2.bf16.msra.mxu0 0
    %101 = vmatprep.mubr.bf16.mxu0 0
    %102 = vmatmul.mubr.bf16.gmra.mxu0 %v67
    %v103 = vpop.f32.mrf.mxu0
    %v104 = vadd.f32 %v52, %v103
    %v105 = vpop.f32.mrf.mxu0
    %v106 = vpop.f32.mrf.mxu0
    %v107 = vpop.f32.mrf.mxu0
    %108 = vdwg.mxu0
    %v109 = vpack.c.bf16 %v104, %v104
    %110 = vst [vmem:[#allocation7] sm:$0xf] %v109
    // Predicated region
    $region22: #{_fused_forward.1} parent=1 // pred_check
      _
    $region23: #{_fused_forward.1} parent=1 // pred_check_branch
      %112 = sbr.rel (0) target = $region25
    $region24: #{_fused_forward.1} parent=1 // pred_region
      %s114 = ssub.s32 64, 64
      %115 = vsyncadd [#allocation4], %s114
      %s117 = sshll.u32 [#allocation7], 4
      %s118 = int_to_ptr.vmem [resolvable:$true] %s117
      %120 = dma.vmem_to_hbm [thread:$0]  %s118, 64, %s3, [#allocation4]
    $region25: #{_fused_forward.1} parent=1 // pred_fallthru
      _
    // Predicated region
    $region26: #{_fused_forward.1} parent=1 // pred_check
      _
    $region27: #{_fused_forward.1} parent=1 // pred_check_branch
      %122 = sbr.rel (0) target = $region29
    $region28: #{_fused_forward.1} parent=1 // pred_region
      %123 = dma.done [#allocation4], 64
    $region29: #{_fused_forward.1} parent=1 // pred_fallthru
      _
    %124 = vsyncpa [#allocation3], 1
    %125 = vsyncpa [#allocation6], 1
    %126 = vsyncpa [#allocation4], 1

</llo_original>
